<compile_context>
chip_gen: v7x
topology: tpu7x:2x2x1
jax: 0.10.0
libtpu: 0.0.40
codegen_flags: <defaults>
</compile_context>

<pallas_src>
import jax
import jax.numpy as jnp
from jax.experimental import pallas as pl
from jax.experimental.pallas import tpu as pltpu

_IN_DIM = 224
_HID_DIM = 3
_OUT_DIM = 10
_VMEM_LIMIT_BYTES = 48 * 1024 * 1024  # fits v7x's 64 MiB physical VMEM with headroom


def _default_tile_b():
    """Pick a batch-tile size per TPU generation (multiple of 8)."""
    try:
        kind = jax.devices()[0].device_kind.lower()
    except Exception:
        return 8192
    if ("v5 lite" in kind) or ("v5e" in kind) or ("v5lite" in kind):
        return 4096   # v5e: 16 MiB scoped VMEM default; 2 x 3.7 MiB x-buffers fit comfortably
    if "7" in kind:
        return 16384  # v7x: 3.2 TB/s HBM -> bigger tile needed to amortize per-step overhead
    return 8192       # v6e (and anything else)


def _mlp_logsoftmax_kernel(x_ref, w1_ref, b1_ref, w2_ref, b2_ref, o_ref):
    x = x_ref[...]                                                    # (tb, 224)

    # Linear 1 + ReLU  (dropout = identity in eval mode)
    h = jnp.dot(x, w1_ref[...], preferred_element_type=jnp.float32)  # (tb, 3)
    h = h + b1_ref[...]
    h = jnp.maximum(h, 0.0)

    # Linear 2 + ReLU  (dropout = identity in eval mode)
    y = jnp.dot(h, w2_ref[...], preferred_element_type=jnp.float32)  # (tb, 10)
    y = y + b2_ref[...]
    y = jnp.maximum(y, 0.0)

    # log_softmax along dim=1 (feature axis), numerically stable form
    m = jnp.max(y, axis=-1, keepdims=True)
    z = y - m
    lse = jnp.log(jnp.sum(jnp.exp(z), axis=-1, keepdims=True))
    o_ref[...] = z - lse


def _pick_tile(B, tile_b):
    """Choose the batch tile: whole batch if tiny; >=2 tiles for moderate B; tile_b otherwise."""
    tile_b = max(8, (tile_b // 8) * 8)
    if B <= 8:
        return B                       # single full-extent block (B is the full array dim)
    if B <= 2 * tile_b:
        # Split into at least 2 tiles so v7x's second TensorCore gets work.
        half = (B + 1) // 2
        return max(8, ((half + 7) // 8) * 8)
    return tile_b


def mlp_forward(x, w1, b1, w2, b2, *, tile_b=None):
    """x: (B, 224) f32; w1: (224, 3); b1: (1, 3); w2: (3, 10); b2: (1, 10) -> (B, 10) f32."""
    B, in_dim = x.shape
    out_dim = w2.shape[1]

    if tile_b is None:
        tile_b = _default_tile_b()
    tb = _pick_tile(B, tile_b)
    grid = (pl.cdiv(B, tb),)

    weight_bytes = (w1.size + b1.size + w2.size + b2.size) * 4
    cost = pl.CostEstimate(
        flops=2 * B * in_dim * _HID_DIM + 2 * B * _HID_DIM * out_dim,
        transcendentals=B * (out_dim + 1),                       # exp per logit + log per row
        bytes_accessed=B * in_dim * 4 + B * out_dim * 4 + weight_bytes,
    )

    return pl.pallas_call(
        _mlp_logsoftmax_kernel,
        out_shape=jax.ShapeDtypeStruct((B, out_dim), jnp.float32),
        grid=grid,
        in_specs=[
            # x: tiled along batch -> double-buffered DMA, runs at the HBM roofline.
            pl.BlockSpec((tb, in_dim), lambda i: (i, 0)),
            # Weights/biases: constant block index -> stay resident in VMEM across steps.
            pl.BlockSpec(w1.shape, lambda i: (0, 0)),
            pl.BlockSpec(b1.shape, lambda i: (0, 0)),
            pl.BlockSpec(w2.shape, lambda i: (0, 0)),
            pl.BlockSpec(b2.shape, lambda i: (0, 0)),
        ],
        out_specs=pl.BlockSpec((tb, out_dim), lambda i: (i, 0)),
        compiler_params=pltpu.CompilerParams(
            # Each batch tile is independent -> parallel (lets v7x shard across its 2 TCs).
            dimension_semantics=("parallel",),
            # Big tiles (esp. v7x TILE_B=16384 -> ~29 MiB of x buffers) exceed the scoped
            # VMEM defaults (v5e 16 MiB / v6e 32 MiB / v7x 32 MiB); 48 MiB stays within
            # v7x's 64 MiB physical VMEM.
            vmem_limit_bytes=_VMEM_LIMIT_BYTES,
        ),
        cost_estimate=cost,
    )(x, w1, b1, w2, b2)


def _mlp_forward_ref(x, w1, b1, w2, b2):
    """Pure-JAX reference for correctness checking."""
    h = jnp.maximum(x @ w1 + b1, 0.0)
    y = jnp.maximum(h @ w2 + b2, 0.0)
    return jax.nn.log_softmax(y, axis=1)


def _init_linear(key, fan_in, fan_out):
    """PyTorch-style uniform(-1/sqrt(fan_in), 1/sqrt(fan_in)) init, stored as (in, out)."""
    kw, kb = jax.random.split(key)
    bound = 1.0 / jnp.sqrt(jnp.float32(fan_in))
    w = jax.random.uniform(kw, (fan_in, fan_out), jnp.float32, -bound, bound)
    b = jax.random.uniform(kb, (1, fan_out), jnp.float32, -bound, bound)
    return w, b


if __name__ == "__main__":
    key = jax.random.PRNGKey(0)
    kx, k1, k2, kx2 = jax.random.split(key, 4)

    w1, b1 = _init_linear(k1, _IN_DIM, _HID_DIM)
    w2, b2 = _init_linear(k2, _HID_DIM, _OUT_DIM)

    # Small shape matching the module spec (single-block path).
    B = 2
    x = jax.random.normal(kx, (B, _IN_DIM), jnp.float32)
    out = mlp_forward(x, w1, b1, w2, b2)
    jax.block_until_ready(out)

    ref = _mlp_forward_ref(x, w1, b1, w2, b2)
    assert out.shape == (B, _OUT_DIM)
    assert bool(jnp.all(jnp.abs(out - ref) < 1e-4))
    # log_softmax rows should sum (in prob space) to ~1
    probs_sum = jnp.sum(jnp.exp(out), axis=1)
    assert bool(jnp.all(jnp.abs(probs_sum - 1.0) < 1e-4))

    # Multi-block check: explicit tile_b=8 exercises the 3-step grid path (incl. tile logic).
    B2 = 24
    x2 = jax.random.normal(kx2, (B2, _IN_DIM), jnp.float32)
    out2 = mlp_forward(x2, w1, b1, w2, b2, tile_b=8)
    jax.block_until_ready(out2)
    ref2 = _mlp_forward_ref(x2, w1, b1, w2, b2)
    assert out2.shape == (B2, _OUT_DIM)
    assert bool(jnp.all(jnp.abs(out2 - ref2) < 1e-4))

    # Default-tile path for moderate B: splits into >=2 tiles (keeps both v7x TCs busy),
    # and exercises a partial last tile (B2 not a multiple of tb).
    out3 = mlp_forward(x2, w1, b1, w2, b2)
    jax.block_until_ready(out3)
    assert bool(jnp.all(jnp.abs(out3 - ref2) < 1e-4))

    print("KERNEL_OK")
</pallas_src>

<mosaic_0001>
module attributes {stable_mosaic.version = 11 : i64} {
  func.func @_mlp_logsoftmax_kernel(%arg0: i32, %arg1: memref<2x224xf32, #tpu.memory_space<vmem>>, %arg2: memref<224x3xf32, #tpu.memory_space<vmem>>, %arg3: memref<1x3xf32, #tpu.memory_space<vmem>>, %arg4: memref<3x10xf32, #tpu.memory_space<vmem>>, %arg5: memref<1x10xf32, #tpu.memory_space<vmem>>, %arg6: memref<2x10xf32, #tpu.memory_space<vmem>>) attributes {dimension_semantics = [#tpu.dimension_semantics<parallel>], iteration_bounds = array<i64: 1>, scalar_prefetch = 0 : i64, scratch_operands = 0 : i64, tpu.core_type = #tpu.core_type<tc>, window_params = [{transform_indices = @transform_0, window_bounds = array<i64: 2, 224>}, {pipeline_mode = #tpu.pipeline_mode<synchronous>, transform_indices = @transform_1, window_bounds = array<i64: 224, 3>}, {pipeline_mode = #tpu.pipeline_mode<synchronous>, transform_indices = @transform_2, window_bounds = array<i64: 1, 3>}, {pipeline_mode = #tpu.pipeline_mode<synchronous>, transform_indices = @transform_3, window_bounds = array<i64: 3, 10>}, {pipeline_mode = #tpu.pipeline_mode<synchronous>, transform_indices = @transform_4, window_bounds = array<i64: 1, 10>}, {transform_indices = @transform_5, window_bounds = array<i64: 2, 10>}]} {
    %c0 = arith.constant 0 : index
    %c0_0 = arith.constant 0 : index
    %0 = vector.load %arg1[%c0, %c0_0] : memref<2x224xf32, #tpu.memory_space<vmem>>, vector<2x224xf32>
    %c0_1 = arith.constant 0 : index
    %c0_2 = arith.constant 0 : index
    %1 = vector.load %arg2[%c0_1, %c0_2] : memref<224x3xf32, #tpu.memory_space<vmem>>, vector<224x3xf32>
    %cst = arith.constant dense<0.000000e+00> : vector<2x3xf32>
    %2 = tpu.matmul %0, %1, %cst {dimension_numbers = #tpu.dot_dimension_numbers<[1], [0], [0], [1], [0, 0, 1, 1], [], []>} : vector<2x224xf32>, vector<224x3xf32>, vector<2x3xf32> -> vector<2x3xf32>
    %c0_3 = arith.constant 0 : index
    %c0_4 = arith.constant 0 : index
    %3 = vector.load %arg3[%c0_3, %c0_4] : memref<1x3xf32, #tpu.memory_space<vmem>>, vector<1x3xf32>
    %4 = vector.broadcast %3 : vector<1x3xf32> to vector<2x3xf32>
    %5 = arith.addf %2, %4 : vector<2x3xf32>
    %cst_5 = arith.constant 0.000000e+00 : f32
    %6 = vector.broadcast %cst_5 : f32 to vector<2x3xf32>
    %7 = arith.maximumf %5, %6 : vector<2x3xf32>
    %c0_6 = arith.constant 0 : index
    %c0_7 = arith.constant 0 : index
    %8 = vector.load %arg4[%c0_6, %c0_7] : memref<3x10xf32, #tpu.memory_space<vmem>>, vector<3x10xf32>
    %cst_8 = arith.constant dense<0.000000e+00> : vector<2x10xf32>
    %9 = tpu.matmul %7, %8, %cst_8 {dimension_numbers = #tpu.dot_dimension_numbers<[1], [0], [0], [1], [0, 0, 1, 1], [], []>} : vector<2x3xf32>, vector<3x10xf32>, vector<2x10xf32> -> vector<2x10xf32>
    %c0_9 = arith.constant 0 : index
    %c0_10 = arith.constant 0 : index
    %10 = vector.load %arg5[%c0_9, %c0_10] : memref<1x10xf32, #tpu.memory_space<vmem>>, vector<1x10xf32>
    %11 = vector.broadcast %10 : vector<1x10xf32> to vector<2x10xf32>
    %12 = arith.addf %9, %11 : vector<2x10xf32>
    %cst_11 = arith.constant 0.000000e+00 : f32
    %13 = vector.broadcast %cst_11 : f32 to vector<2x10xf32>
    %14 = arith.maximumf %12, %13 : vector<2x10xf32>
    %cst_12 = arith.constant dense<0xFF800000> : vector<2xf32>
    %15 = vector.multi_reduction <maximumf>, %14, %cst_12 [1] : vector<2x10xf32> to vector<2xf32>
    %16 = vector.shape_cast %15 : vector<2xf32> to vector<2x1xf32>
    %17 = vector.broadcast %16 : vector<2x1xf32> to vector<2x10xf32>
    %18 = arith.subf %14, %17 : vector<2x10xf32>
    %19 = math.exp %18 : vector<2x10xf32>
    %cst_13 = arith.constant dense<0.000000e+00> : vector<2xf32>
    %20 = vector.multi_reduction <add>, %19, %cst_13 [1] : vector<2x10xf32> to vector<2xf32>
    %21 = vector.shape_cast %20 : vector<2xf32> to vector<2x1xf32>
    %22 = math.log %21 : vector<2x1xf32>
    %23 = vector.broadcast %22 : vector<2x1xf32> to vector<2x10xf32>
    %24 = arith.subf %18, %23 : vector<2x10xf32>
    %c0_14 = arith.constant 0 : index
    %c0_15 = arith.constant 0 : index
    %25 = vector.load %arg6[%c0_14, %c0_15] : memref<2x10xf32, #tpu.memory_space<vmem>>, vector<2x10xf32>
    tpu.vector_store %arg6[%c0_14, %c0_15], %24 {strides = array<i32>} : memref<2x10xf32, #tpu.memory_space<vmem>>, vector<2x10xf32>,
    return
  }
  func.func @transform_0(%arg0: i32) -> (i32, i32) {
    %c0_i32 = arith.constant 0 : i32
    %c0_i32_0 = arith.constant 0 : i32
    return %arg0, %c0_i32 : i32, i32
  }
  func.func @transform_1(%arg0: i32) -> (i32, i32) {
    %c0_i32 = arith.constant 0 : i32
    %c0_i32_0 = arith.constant 0 : i32
    %c0_i32_1 = arith.constant 0 : i32
    return %c0_i32, %c0_i32_0 : i32, i32
  }
  func.func @transform_2(%arg0: i32) -> (i32, i32) {
    %c0_i32 = arith.constant 0 : i32
    %c0_i32_0 = arith.constant 0 : i32
    %c0_i32_1 = arith.constant 0 : i32
    return %c0_i32, %c0_i32_0 : i32, i32
  }
  func.func @transform_3(%arg0: i32) -> (i32, i32) {
    %c0_i32 = arith.constant 0 : i32
    %c0_i32_0 = arith.constant 0 : i32
    %c0_i32_1 = arith.constant 0 : i32
    return %c0_i32, %c0_i32_0 : i32, i32
  }
  func.func @transform_4(%arg0: i32) -> (i32, i32) {
    %c0_i32 = arith.constant 0 : i32
    %c0_i32_0 = arith.constant 0 : i32
    %c0_i32_1 = arith.constant 0 : i32
    return %c0_i32, %c0_i32_0 : i32, i32
  }
  func.func @transform_5(%arg0: i32) -> (i32, i32) {
    %c0_i32 = arith.constant 0 : i32
    %c0_i32_0 = arith.constant 0 : i32
    return %arg0, %c0_i32 : i32, i32
  }
}

</mosaic_0001>

<llo_original>
// kernel: tpu_custom_call.1
$region0: #{tpu_custom_call.1}
  #allocation0 [shape = 'u32[]', space=smem, size = 0x4, offset = 0x4, fixed_abs, tag = 'smem constant byte address 0x4 - core index']
  #allocation1 [shape = 'u32[144,128]{1,0:T(1,128)}', space=vmem, size = 0x12000, scoped, tag = 'internal scratch']
  %s0 = inlined_call_operand.vmem [shape: f32[2,224], index: 0, kind: input, shape index: {}]
  %s1 = inlined_call_operand.vmem [shape: f32[224,3], index: 1, kind: input, shape index: {}]
  %s2 = inlined_call_operand.vmem [shape: f32[1,3], index: 2, kind: input, shape index: {}]
  %s3 = inlined_call_operand.vmem [shape: f32[3,10], index: 3, kind: input, shape index: {}]
  %s4 = inlined_call_operand.vmem [shape: f32[1,10], index: 4, kind: input, shape index: {}]
  %s5 = inlined_call_operand.hbm [shape: f32[2,10], index: 5, kind: output, shape index: {}]
  %s6 = sld [smem:[#allocation0]]
  $region30: #{tpu_custom_call.1} parent=0
    _
  %s8 = ssub.s32 1, %s6
  %s9 = scalar_select 0, %s8, %s6
  $region1: #{tpu_custom_call.1} parent=0
    #allocation2 [shape = 'u8[1024]{0}', space=vmem, size = 0x400, scoped, tag = 'output window, operand 0, single buffered']
    #allocation3 [shape = 's32[1]{0}', space=sflag, size = 0x4, scoped, tag = 'scoped memory for tpu_custom_call.1']
    %10 = vsyncpa [#allocation3], 0
    // Predicated region
    $region2: #{tpu_custom_call.1} parent=1 // pred_check
      _
    $region3: #{tpu_custom_call.1} parent=1 // pred_check_branch
      %12 = sbr.rel (0) target = $region5
    $region4: #{tpu_custom_call.1} parent=1 // pred_region
      _
    $region5: #{tpu_custom_call.1} parent=1 // pred_fallthru
      _
    // Predicated region
    $region6: #{tpu_custom_call.1} parent=1 // pred_check
      _
    $region7: #{tpu_custom_call.1} parent=1 // pred_check_branch
      %14 = sbr.rel (0) target = $region9
    $region8: #{tpu_custom_call.1} parent=1 // pred_region
      _
    $region9: #{tpu_custom_call.1} parent=1 // pred_fallthru
      _
    // Predicated region
    $region10: #{tpu_custom_call.1} parent=1 // pred_check
      _
    $region11: #{tpu_custom_call.1} parent=1 // pred_check_branch
      %16 = sbr.rel (0) target = $region13
    $region12: #{tpu_custom_call.1} parent=1 // pred_region
      _
    $region13: #{tpu_custom_call.1} parent=1 // pred_fallthru
      _
    // Predicated region
    $region14: #{tpu_custom_call.1} parent=1 // pred_check
      _
    $region15: #{tpu_custom_call.1} parent=1 // pred_check_branch
      %18 = sbr.rel (0) target = $region17
    $region16: #{tpu_custom_call.1} parent=1 // pred_region
      _
    $region17: #{tpu_custom_call.1} parent=1 // pred_fallthru
      _
    // Predicated region
    $region18: #{tpu_custom_call.1} parent=1 // pred_check
      _
    $region19: #{tpu_custom_call.1} parent=1 // pred_check_branch
      %20 = sbr.rel (0) target = $region21
    $region20: #{tpu_custom_call.1} parent=1 // pred_region
      _
    $region21: #{tpu_custom_call.1} parent=1 // pred_fallthru
      _
    %v21 = vld [vmem:[%s0] sm:$0xf]
    %v22 = vld [vmem:[%s1] sm:$0xff]
    %v23 = vld [vmem:[%s1 + $0x8] sm:$0xff]
    %v24 = vld [vmem:[%s1 + $0x10] sm:$0xff]
    %v25 = vld [vmem:[%s1 + $0x18] sm:$0xff]
    %v26 = vld [vmem:[%s1 + $0x20] sm:$0xff]
    %v27 = vld [vmem:[%s1 + $0x28] sm:$0xff]
    %v28 = vld [vmem:[%s1 + $0x30] sm:$0xff]
    %v29 = vld [vmem:[%s1 + $0x38] sm:$0xff]
    %v30 = vld [vmem:[%s1 + $0x40] sm:$0xff]
    %v31 = vld [vmem:[%s1 + $0x48] sm:$0xff]
    %v32 = vld [vmem:[%s1 + $0x50] sm:$0xff]
    %v33 = vld [vmem:[%s1 + $0x58] sm:$0xff]
    %v34 = vld [vmem:[%s1 + $0x60] sm:$0xff]
    %v35 = vld [vmem:[%s1 + $0x68] sm:$0xff]
    %v36 = vld [vmem:[%s1 + $0x70] sm:$0xff]
    %v37 = vld [vmem:[%s1 + $0x78] sm:$0xff]
    %v38 = vld [vmem:[%s1 + $0x80] sm:$0xff]
    %v39 = vld [vmem:[%s1 + $0x88] sm:$0xff]
    %v40 = vld [vmem:[%s1 + $0x90] sm:$0xff]
    %v41 = vld [vmem:[%s1 + $0x98] sm:$0xff]
    %v42 = vld [vmem:[%s1 + $0xa0] sm:$0xff]
    %v43 = vld [vmem:[%s1 + $0xa8] sm:$0xff]
    %v44 = vld [vmem:[%s1 + $0xb0] sm:$0xff]
    %v45 = vld [vmem:[%s1 + $0xb8] sm:$0xff]
    %v46 = vld [vmem:[%s1 + $0xc0] sm:$0xff]
    %v47 = vld [vmem:[%s1 + $0xc8] sm:$0xff]
    %v48 = vld [vmem:[%s1 + $0xd0] sm:$0xff]
    %v49 = vld [vmem:[%s1 + $0xd8] sm:$0xff]
    %v50 = vld [vmem:[%s2] sm:$0x1]
    %v52 = vlaneseq
    %v53 = vshrl.u32 %v52, 7
    %v54 = vsub.s32 0, %v53
    %v55 = vrot.slane %v50, %v54
    %v59 = vunpack.c.l.s4 1983009808
    %v60 = vunpack.c.0.s8 %v59
    %v61 = vlaneseq
    %v62 = vshrl.u32 %v61, 7
    %v63 = vsub.s32 %v60, %v62
    %v64 = vrot.slane %v21, %v63
    %v65 = vcombine.high %v64, %v64
    %vm67 = vcmask 785408
    %v68 = vsel %vm67, %v65, 0
    %70 = vmatprep.subr.mxu0 0.0
    %71 = vmatpush1.msra.mxu0 %v22
    %72 = vmatprep.subr.mxu0 0.0
    %73 = vmatpush1.msra.mxu0 %v23
    %74 = vmatprep.subr.mxu0 0.0
    %75 = vmatpush1.msra.mxu0 %v24
    %76 = vmatprep.subr.mxu0 0.0
    %77 = vmatpush1.msra.mxu0 %v25
    %78 = vmatprep.subr.mxu0 0.0
    %79 = vmatpush1.msra.mxu0 %v26
    %80 = vmatprep.subr.mxu0 0.0
    %81 = vmatpush1.msra.mxu0 %v27
    %82 = vmatprep.subr.mxu0 0.0
    %83 = vmatpush1.msra.mxu0 %v28
    %84 = vmatprep.subr.mxu0 0.0
    %85 = vmatpush1.msra.mxu0 %v29
    %86 = vmatprep.subr.mxu0 0.0
    %87 = vmatpush1.msra.mxu0 %v30
    %88 = vmatprep.subr.mxu0 0.0
    %89 = vmatpush1.msra.mxu0 %v31
    %90 = vmatprep.subr.mxu0 0.0
    %91 = vmatpush1.msra.mxu0 %v32
    %92 = vmatprep.subr.mxu0 0.0
    %93 = vmatpush1.msra.mxu0 %v33
    %94 = vmatprep.subr.mxu0 0.0
    %95 = vmatpush1.msra.mxu0 %v34
    %96 = vmatprep.subr.mxu0 0.0
    %97 = vmatpush1.msra.mxu0 %v35
    %98 = vmatprep.subr.mxu0 0.0
    %99 = vmatpush1.msra.mxu0 %v36
    %100 = vmatprep.subr.mxu0 0.0
    %101 = vmatpush1.msra.mxu0 %v37
    %102 = vmatprep.subr.mxu0 0.0
    %103 = vmatpush1.msra.mxu0 %v38
    %104 = vmatprep.subr.mxu0 0.0
    %105 = vmatpush1.msra.mxu0 %v39
    %106 = vmatprep.subr.mxu0 0.0
    %107 = vmatpush1.msra.mxu0 %v40
    %108 = vmatprep.subr.mxu0 0.0
    %109 = vmatpush1.msra.mxu0 %v41
    %110 = vmatprep.subr.mxu0 0.0
    %111 = vmatpush1.msra.mxu0 %v42
    %112 = vmatprep.subr.mxu0 0.0
    %113 = vmatpush1.msra.mxu0 %v43
    %114 = vmatprep.subr.mxu0 0.0
    %115 = vmatpush1.msra.mxu0 %v44
    %116 = vmatprep.subr.mxu0 0.0
    %117 = vmatpush1.msra.mxu0 %v45
    %118 = vmatprep.subr.mxu0 0.0
    %119 = vmatpush1.msra.mxu0 %v46
    %120 = vmatprep.subr.mxu0 0.0
    %121 = vmatpush1.msra.mxu0 %v47
    %122 = vmatprep.subr.mxu0 0.0
    %123 = vmatpush1.msra.mxu0 %v48
    %124 = vmatprep.subr.mxu0 0.0
    %125 = vmatpush1.msra.mxu0 %v49
    %126 = vmatprep.subr.mxu0 0.0
    %127 = vmatpush1.msra.mxu0 0.0
    %128 = vmatprep.subr.mxu0 0.0
    %129 = vmatpush1.msra.mxu0 0.0
    %130 = vmatprep.subr.mxu0 0.0
    %131 = vmatpush1.msra.mxu0 0.0
    %132 = vmatprep.subr.mxu0 0.0
    %133 = vmatpush1.msra.mxu0 0.0
    %134 = vmatprep.mubr.f32.mxu0 %v68
    %135 = vmatmul.mubr.f32.gmra.mrb[0].mxu0 %v64
    %v136 = vpop.f32.mrb[0].mxu0
    %v137 = vadd.f32 %v55, %v136
    %v138 = vpop.f32.mrb[0].mxu0
    %139 = vdwg.mxu0
    %v140 = vmax.f32 %v137, 0.0
    %v141 = vld [vmem:[%s3] sm:$0x7]
    %v142 = vld [vmem:[%s4] sm:$0x1]
    %v144 = vlaneseq
    %v145 = vshrl.u32 %v144, 7
    %v146 = vsub.s32 0, %v145
    %v147 = vrot.slane %v142, %v146
    %vm149 = vcmask 23552
    %v151 = vsel %vm149, %v140, 0
    %vm153 = vcmask 1042432
    %v155 = vsel %vm153, %v141, 0
    %157 = vmatprep.subr.mxu0 0.0
    %158 = vmatpush1.msra.mxu0 %v155
    %159 = vmatprep.subr.mxu0 0.0
    %160 = vmatpush1.msra.mxu0 0.0
    %161 = vmatprep.subr.mxu0 0.0
    %162 = vmatpush1.msra.mxu0 0.0
    %163 = vmatprep.subr.mxu0 0.0
    %164 = vmatpush1.msra.mxu0 0.0
    %165 = vmatprep.subr.mxu0 0.0
    %166 = vmatpush1.msra.mxu0 0.0
    %167 = vmatprep.subr.mxu0 0.0
    %168 = vmatpush1.msra.mxu0 0.0
    %169 = vmatprep.subr.mxu0 0.0
    %170 = vmatpush1.msra.mxu0 0.0
    %171 = vmatprep.subr.mxu0 0.0
    %172 = vmatpush1.msra.mxu0 0.0
    %173 = vmatprep.subr.mxu0 0.0
    %174 = vmatpush1.msra.mxu0 0.0
    %175 = vmatprep.subr.mxu0 0.0
    %176 = vmatpush1.msra.mxu0 0.0
    %177 = vmatprep.subr.mxu0 0.0
    %178 = vmatpush1.msra.mxu0 0.0
    %179 = vmatprep.subr.mxu0 0.0
    %180 = vmatpush1.msra.mxu0 0.0
    %181 = vmatprep.subr.mxu0 0.0
    %182 = vmatpush1.msra.mxu0 0.0
    %183 = vmatprep.subr.mxu0 0.0
    %184 = vmatpush1.msra.mxu0 0.0
    %185 = vmatprep.subr.mxu0 0.0
    %186 = vmatpush1.msra.mxu0 0.0
    %187 = vmatprep.subr.mxu0 0.0
    %188 = vmatpush1.msra.mxu0 0.0
    %189 = vmatprep.subr.mxu0 0.0
    %190 = vmatpush1.msra.mxu0 0.0
    %191 = vmatprep.subr.mxu0 0.0
    %192 = vmatpush1.msra.mxu0 0.0
    %193 = vmatprep.subr.mxu0 0.0
    %194 = vmatpush1.msra.mxu0 0.0
    %195 = vmatprep.subr.mxu0 0.0
    %196 = vmatpush1.msra.mxu0 0.0
    %197 = vmatprep.subr.mxu0 0.0
    %198 = vmatpush1.msra.mxu0 0.0
    %199 = vmatprep.subr.mxu0 0.0
    %200 = vmatpush1.msra.mxu0 0.0
    %201 = vmatprep.subr.mxu0 0.0
    %202 = vmatpush1.msra.mxu0 0.0
    %203 = vmatprep.subr.mxu0 0.0
    %204 = vmatpush1.msra.mxu0 0.0
    %205 = vmatprep.subr.mxu0 0.0
    %206 = vmatpush1.msra.mxu0 0.0
    %207 = vmatprep.subr.mxu0 0.0
    %208 = vmatpush1.msra.mxu0 0.0
    %209 = vmatprep.subr.mxu0 0.0
    %210 = vmatpush1.msra.mxu0 0.0
    %211 = vmatprep.subr.mxu0 0.0
    %212 = vmatpush1.msra.mxu0 0.0
    %213 = vmatprep.subr.mxu0 0.0
    %214 = vmatpush1.msra.mxu0 0.0
    %215 = vmatprep.subr.mxu0 0.0
    %216 = vmatpush1.msra.mxu0 0.0
    %217 = vmatprep.subr.mxu0 0.0
    %218 = vmatpush1.msra.mxu0 0.0
    %219 = vmatprep.subr.mxu0 0.0
    %220 = vmatpush1.msra.mxu0 0.0
    %221 = vmatprep.mubr.f32.mxu0 0.0
    %222 = vmatmul.mubr.f32.gmra.mrb[0].mxu0 %v151
    %v223 = vpop.f32.mrb[0].mxu0
    %v224 = vadd.f32 %v147, %v223
    %v225 = vpop.f32.mrb[0].mxu0
    %226 = vdwg.mxu0
    %v227 = vmax.f32 %v224, 0.0
    %vm228 = vcmask 74752
    %v229 = vsel %vm228, %v227, -inf
    %230 = vmax.xlane.f32.xlu0 %v229
    %v231 = vpop.xlane.xlu0 %230
    %v232 = vsub.f32 %v227, %v231
    %v233 = vmul.f32 %v232, 1.442695
    %v234 = vpow.pop %v233
    %v235 = vsel %vm228, %v234, 0.0
    %236 = vadd.xlane.f32.xlu0 %v235
    %v237 = vpop.xlane.xlu0 %236
    %v238 = vlog2.pop %v237
    %v239 = vmul.f32 %v238, 0.6931472
    %v240 = vsub.f32 %v232, %v239
    %241 = vst.msk [vmem:[#allocation2] sm:$0x3] %vm228, %v240
    // Predicated region
    $region22: #{tpu_custom_call.1} parent=1 // pred_check
      _
    $region23: #{tpu_custom_call.1} parent=1 // pred_check_branch
      %243 = sbr.rel (0) target = $region25
    $region24: #{tpu_custom_call.1} parent=1 // pred_region
      %s245 = ssub.s32 32, 32
      %246 = vsyncadd [#allocation3], %s245
      %s248 = sshll.u32 [#allocation2], 4
      %s249 = int_to_ptr.vmem [resolvable:$true] %s248
      %251 = dma.vmem_to_hbm [thread:$0]  %s249, 32, %s5, [#allocation3]
    $region25: #{tpu_custom_call.1} parent=1 // pred_fallthru
      _
    // Predicated region
    $region26: #{tpu_custom_call.1} parent=1 // pred_check
      _
    $region27: #{tpu_custom_call.1} parent=1 // pred_check_branch
      %253 = sbr.rel (0) target = $region29
    $region28: #{tpu_custom_call.1} parent=1 // pred_region
      %254 = dma.done [#allocation3], 32
    $region29: #{tpu_custom_call.1} parent=1 // pred_fallthru
      _
    %255 = vsyncpa [#allocation3], 1

</llo_original>
